<compile_context>
chip_gen: v5e
topology: v5e:2x2
jax: 0.10.0
libtpu: 0.0.40
codegen_flags: <defaults>
</compile_context>

<pallas_src>
import jax
import jax.numpy as jnp
from jax.experimental import pallas as pl
from jax.experimental.pallas import tpu as pltpu

_LANE = 128
_BLOCK_BYTES_TARGET = 4 << 20       # ~4 MiB per block (per perf review: 2-4 MiB)
_MIN_PALLAS_ELEMS = 256 * 1024      # below ~1 MiB f32, fused XLA wins on launch overhead


def _affine_kernel(w_ref, b_ref, x_ref, o_ref):
    # 1x1 conv, C_in = C_out = 1  <=>  y = w * x + b (scalar affine).
    w = w_ref[0]
    b = b_ref[0]
    o_ref[...] = (x_ref[...] * w + b).astype(o_ref.dtype)


def _affine_pallas(x2d, w_scalar, b_scalar, tile_rows):
    rows, lanes = x2d.shape
    grid = (pl.cdiv(rows, tile_rows),)   # ragged last block is masked by Pallas
    block_bytes = tile_rows * lanes * x2d.dtype.itemsize
    # in + out, double-buffered, plus headroom; never below the v5e scoped default.
    vmem_limit = max(16 << 20, 4 * block_bytes + (2 << 20))
    return pl.pallas_call(
        _affine_kernel,
        out_shape=jax.ShapeDtypeStruct(x2d.shape, x2d.dtype),
        grid=grid,
        in_specs=[
            pl.BlockSpec(memory_space=pltpu.SMEM),               # conv weight (scalar)
            pl.BlockSpec(memory_space=pltpu.SMEM),               # conv bias (scalar)
            pl.BlockSpec((tile_rows, lanes), lambda i: (i, 0)),  # lane-dense input tile
        ],
        out_specs=pl.BlockSpec((tile_rows, lanes), lambda i: (i, 0)),
        compiler_params=pltpu.CompilerParams(
            dimension_semantics=("parallel",),
            vmem_limit_bytes=int(vmem_limit),
        ),
        cost_estimate=pl.CostEstimate(
            flops=2 * int(x2d.size),
            transcendentals=0,
            bytes_accessed=2 * int(x2d.size) * int(x2d.dtype.itemsize),
        ),
    )(w_scalar, b_scalar, x2d)


def dynamic_model_forward(x, weight, bias, *, force_pallas=False):
    """Forward of DynamicModel: y = Conv2d(1,1,1)(x) if x is not None else None.

    x:      (N, 1, H, W), f32 or bf16 (or None).
    weight: (1, 1, 1, 1) f32 conv weight.
    bias:   (1,) f32 conv bias.
    """
    if x is None:
        return None

    w_scalar = weight.reshape(1).astype(jnp.float32)
    b_scalar = bias.reshape(1).astype(jnp.float32)

    n = int(x.size)
    if n < _MIN_PALLAS_ELEMS and not force_pallas:
        # Small tensors: custom-call launch + reshape plumbing dwarfs the few
        # hundred KiB of HBM traffic; let XLA fuse the scalar affine.
        return (x * w_scalar[0] + b_scalar[0]).astype(x.dtype)

    orig_shape = x.shape
    itemsize = int(x.dtype.itemsize)
    sublane = 16 if x.dtype == jnp.bfloat16 else 8

    # Lane-dense slab: flatten to (rows, 128).  Pad ONLY up to the next 128
    # lanes (and at least one full sublane tile) -- usually a no-op.
    rows = pl.cdiv(n, _LANE)
    rows_alloc = max(rows, sublane)
    n_alloc = rows_alloc * _LANE

    flat = x.reshape(-1)
    if n_alloc != n:
        flat = jnp.pad(flat, (0, n_alloc - n))
    x2d = flat.reshape(rows_alloc, _LANE)

    # Block size in bytes (~4 MiB), dtype-aware, capped so large inputs give
    # >= 4 grid blocks (v7x megacore + pipeline), rounded to the sublane tile.
    tile_rows_max = _BLOCK_BYTES_TARGET // (_LANE * itemsize)   # 8192 f32, 16384 bf16
    tile_rows = min(tile_rows_max, pl.cdiv(rows_alloc, 4))
    tile_rows = max(sublane, pl.cdiv(tile_rows, sublane) * sublane)

    out2d = _affine_pallas(x2d, w_scalar, b_scalar, tile_rows)

    if n_alloc != n:
        # Only the (rare) lane-padded path pays for a slice copy.
        return out2d.reshape(-1)[:n].reshape(orig_shape)
    return out2d.reshape(orig_shape)


if __name__ == "__main__":
    key = jax.random.PRNGKey(0)
    k_x, k_w, k_b, k_big, k_rag = jax.random.split(key, 5)

    # Deterministic synthetic parameters (shapes from nn.Conv2d(1, 1, 1)).
    weight = jax.random.normal(k_w, (1, 1, 1, 1), dtype=jnp.float32)
    bias = jax.random.normal(k_b, (1,), dtype=jnp.float32)
    w = weight.reshape(())
    b = bias.reshape(())

    # 1) Test-sized input (2, 1, 16, 16): below threshold -> fused-XLA fast path.
    x_small = jax.random.normal(k_x, (2, 1, 16, 16), dtype=jnp.float32)
    y_small = jax.block_until_ready(dynamic_model_forward(x_small, weight, bias))
    assert y_small.shape == (2, 1, 16, 16)
    assert jnp.allclose(y_small, x_small * w + b, atol=1e-6, rtol=1e-6)

    # 2) Same small input forced through the Pallas kernel
    #    (exercises the lane-pad + minimum-sublane path).
    y_small_pl = jax.block_until_ready(
        dynamic_model_forward(x_small, weight, bias, force_pallas=True))
    assert jnp.allclose(y_small_pl, x_small * w + b, atol=1e-6, rtol=1e-6)

    # 3) Non-tile-aligned rows but lane-aligned size (1, 1, 1284, 128):
    #    no host pad/slice, ragged boundary block masked inside the kernel.
    x_rag = jax.random.normal(k_rag, (1, 1, 1284, 128), dtype=jnp.float32)
    y_rag = jax.block_until_ready(
        dynamic_model_forward(x_rag, weight, bias, force_pallas=True))
    assert y_rag.shape == x_rag.shape
    assert jnp.allclose(y_rag, x_rag * w + b, atol=1e-5, rtol=1e-5)

    # 4) Larger f32 input (2, 1, 512, 512): aligned fast path, 4 parallel blocks.
    x_big = jax.random.normal(k_big, (2, 1, 512, 512), dtype=jnp.float32)
    y_big = jax.block_until_ready(dynamic_model_forward(x_big, weight, bias))
    assert y_big.shape == x_big.shape
    assert jnp.allclose(y_big, x_big * w + b, atol=1e-5, rtol=1e-5)

    # 5) bf16 I/O through the kernel (halves HBM bytes; block bytes kept constant).
    x_bf16 = x_big.astype(jnp.bfloat16)
    y_bf16 = jax.block_until_ready(dynamic_model_forward(x_bf16, weight, bias))
    assert y_bf16.dtype == jnp.bfloat16
    ref_bf16 = x_bf16.astype(jnp.float32) * w + b
    assert jnp.allclose(y_bf16.astype(jnp.float32), ref_bf16, atol=5e-2, rtol=5e-2)

    # The `x is None` branch returns None, matching the PyTorch guard.
    assert dynamic_model_forward(None, weight, bias) is None

    print("KERNEL_OK")
</pallas_src>

<mosaic_0001>
module attributes {stable_mosaic.version = 11 : i64} {
  func.func @_affine_kernel(%arg0: i32, %arg1: memref<1xf32, #tpu.memory_space<smem>>, %arg2: memref<1xf32, #tpu.memory_space<smem>>, %arg3: memref<8x128xf32, #tpu.memory_space<vmem>>, %arg4: memref<8x128xf32, #tpu.memory_space<vmem>>) attributes {dimension_semantics = [#tpu.dimension_semantics<parallel>], iteration_bounds = array<i64: 1>, scalar_prefetch = 0 : i64, scratch_operands = 0 : i64, tpu.core_type = #tpu.core_type<tc>, window_params = [{transform_indices = @transform_0, window_bounds = array<i64: 1>}, {transform_indices = @transform_1, window_bounds = array<i64: 1>}, {transform_indices = @transform_2, window_bounds = array<i64: 8, 128>}, {transform_indices = @transform_3, window_bounds = array<i64: 8, 128>}]} {
    %c0 = arith.constant 0 : index
    %0 = memref.load %arg1[%c0] : memref<1xf32, #tpu.memory_space<smem>>
    %c0_0 = arith.constant 0 : index
    %1 = memref.load %arg2[%c0_0] : memref<1xf32, #tpu.memory_space<smem>>
    %c0_1 = arith.constant 0 : index
    %c0_2 = arith.constant 0 : index
    %2 = vector.load %arg3[%c0_1, %c0_2] : memref<8x128xf32, #tpu.memory_space<vmem>>, vector<8x128xf32>
    %3 = vector.broadcast %0 : f32 to vector<8x128xf32>
    %4 = arith.mulf %2, %3 : vector<8x128xf32>
    %5 = vector.broadcast %1 : f32 to vector<8x128xf32>
    %6 = arith.addf %4, %5 : vector<8x128xf32>
    %c0_3 = arith.constant 0 : index
    %c0_4 = arith.constant 0 : index
    %7 = vector.load %arg4[%c0_3, %c0_4] : memref<8x128xf32, #tpu.memory_space<vmem>>, vector<8x128xf32>
    tpu.vector_store %arg4[%c0_3, %c0_4], %6 {strides = array<i32>} : memref<8x128xf32, #tpu.memory_space<vmem>>, vector<8x128xf32>,
    return
  }
  func.func @transform_0(%arg0: i32) -> i32 {
    %c0_i32 = arith.constant 0 : i32
    %c0_i32_0 = arith.constant 0 : i32
    return %c0_i32 : i32
  }
  func.func @transform_1(%arg0: i32) -> i32 {
    %c0_i32 = arith.constant 0 : i32
    %c0_i32_0 = arith.constant 0 : i32
    return %c0_i32 : i32
  }
  func.func @transform_2(%arg0: i32) -> (i32, i32) {
    %c0_i32 = arith.constant 0 : i32
    %c0_i32_0 = arith.constant 0 : i32
    return %arg0, %c0_i32 : i32, i32
  }
  func.func @transform_3(%arg0: i32) -> (i32, i32) {
    %c0_i32 = arith.constant 0 : i32
    %c0_i32_0 = arith.constant 0 : i32
    return %arg0, %c0_i32 : i32, i32
  }
}

</mosaic_0001>

<llo_original>
// kernel: tpu_custom_call.1
$region0: #{tpu_custom_call.1}
  #allocation0 [shape = 'u32[]', space=smem, size = 0x4, offset = 0x4, fixed_abs, tag = 'smem constant byte address 0x4 - core index']
  #allocation1 [shape = 'u32[72,128]{1,0:T(1,128)}', space=vmem, size = 0x9000, scoped, tag = 'internal scratch']
  #allocation2 [shape = 'f32[1]{0:T(128)S(6)}', space=smem, size = 0x200, scoped, tag = 'scoped memory for tpu_custom_call.1']
  #allocation3 [shape = 'f32[1]{0:T(128)S(6)}', space=smem, size = 0x200, scoped, tag = 'scoped memory for tpu_custom_call.1']
  %s0 = inlined_call_operand.<no memory space> [shape: f32[1], index: 0, kind: input, shape index: {}]
  %s1 = inlined_call_operand.<no memory space> [shape: f32[1], index: 1, kind: input, shape index: {}]
  %s2 = inlined_call_operand.hbm [shape: f32[8,128], index: 2, kind: input, shape index: {}]
  %s3 = inlined_call_operand.hbm [shape: f32[8,128], index: 3, kind: output, shape index: {}]
  %s4 = sld [smem:[#allocation0]]
  $region26: #{tpu_custom_call.1} parent=0
    _
  %s6 = ssub.s32 1, %s4
  %s7 = scalar_select 0, %s6, %s4
  %8 = sst [smem:[#allocation2]] %s0
  %9 = sst [smem:[#allocation3]] %s1
  $region1: #{tpu_custom_call.1} parent=0
    #allocation4 [shape = 'u8[4096]{0}', space=vmem, size = 0x1000, scoped, tag = 'input window, operand 2, single buffered']
    #allocation5 [shape = 's32[1]{0}', space=sflag, size = 0x4, scoped, tag = 'scoped memory for tpu_custom_call.1']
    #allocation6 [shape = 's32[1]{0}', space=sflag, size = 0x4, scoped, tag = 'scoped memory for tpu_custom_call.1']
    #allocation7 [shape = 'u8[4096]{0}', space=vmem, size = 0x1000, scoped, tag = 'output window, operand 0, single buffered']
    %10 = vsyncpa [#allocation5], 0
    %11 = vsyncpa [#allocation6], 0
    // Predicated region
    $region2: #{tpu_custom_call.1} parent=1 // pred_check
      _
    $region3: #{tpu_custom_call.1} parent=1 // pred_check_branch
      %13 = sbr.rel (0) target = $region5
    $region4: #{tpu_custom_call.1} parent=1 // pred_region
      _
    $region5: #{tpu_custom_call.1} parent=1 // pred_fallthru
      _
    // Predicated region
    $region6: #{tpu_custom_call.1} parent=1 // pred_check
      _
    $region7: #{tpu_custom_call.1} parent=1 // pred_check_branch
      %15 = sbr.rel (0) target = $region9
    $region8: #{tpu_custom_call.1} parent=1 // pred_region
      _
    $region9: #{tpu_custom_call.1} parent=1 // pred_fallthru
      _
    // Predicated region
    $region10: #{tpu_custom_call.1} parent=1 // pred_check
      _
    $region11: #{tpu_custom_call.1} parent=1 // pred_check_branch
      %17 = sbr.rel (0) target = $region13
    $region12: #{tpu_custom_call.1} parent=1 // pred_region
      %19 = vsyncadd [#allocation5], 0
      %s21 = sshll.u32 %s2, 4
      %s22 = int_to_ptr.hbm [resolvable:$true] %s21
      %s23 = sshll.u32 [#allocation4], 4
      %s24 = int_to_ptr.vmem [resolvable:$true] %s23
      %26 = dma.hbm_to_vmem [thread:$0]  %s22, 128, %s24, [#allocation5]
    $region13: #{tpu_custom_call.1} parent=1 // pred_fallthru
      _
    // Predicated region
    $region14: #{tpu_custom_call.1} parent=1 // pred_check
      _
    $region15: #{tpu_custom_call.1} parent=1 // pred_check_branch
      %28 = sbr.rel (0) target = $region17
    $region16: #{tpu_custom_call.1} parent=1 // pred_region
      %30 = dma.done [#allocation5], 128
    $region17: #{tpu_custom_call.1} parent=1 // pred_fallthru
      _
    %s31 = sld [smem:[#allocation2]]
    %s32 = sld [smem:[#allocation3]]
    %v33 = vld [vmem:[#allocation4] sm:$0xff]
    %v34 = vstv %s31
    %v35 = vmul.f32 %v33, %v34
    %v36 = vstv %s32
    %v37 = vadd.f32 %v35, %v36
    %38 = vst [vmem:[#allocation7] sm:$0xff] %v37
    // Predicated region
    $region18: #{tpu_custom_call.1} parent=1 // pred_check
      _
    $region19: #{tpu_custom_call.1} parent=1 // pred_check_branch
      %40 = sbr.rel (0) target = $region21
    $region20: #{tpu_custom_call.1} parent=1 // pred_region
      %42 = vsyncadd [#allocation6], 0
      %s44 = sshll.u32 [#allocation7], 4
      %s45 = int_to_ptr.vmem [resolvable:$true] %s44
      %s46 = sshll.u32 %s3, 4
      %s47 = int_to_ptr.hbm [resolvable:$true] %s46
      %49 = dma.vmem_to_hbm [thread:$0]  %s45, 128, %s47, [#allocation6]
    $region21: #{tpu_custom_call.1} parent=1 // pred_fallthru
      _
    // Predicated region
    $region22: #{tpu_custom_call.1} parent=1 // pred_check
      _
    $region23: #{tpu_custom_call.1} parent=1 // pred_check_branch
      %51 = sbr.rel (0) target = $region25
    $region24: #{tpu_custom_call.1} parent=1 // pred_region
      %53 = dma.done [#allocation6], 128
    $region25: #{tpu_custom_call.1} parent=1 // pred_fallthru
      _
    %54 = vsyncpa [#allocation5], 1
    %55 = vsyncpa [#allocation6], 1

</llo_original>
